<compile_context>
chip_gen: v7x
topology: tpu7x:2x2x1
jax: 0.10.0
libtpu: 0.0.40
codegen_flags: <defaults>
</compile_context>

<pallas_src>
import jax
import jax.numpy as jnp
from jax import lax
from jax.experimental import pallas as pl
from jax.experimental.pallas import tpu as pltpu


def _round_up(n, m):
    return ((n + m - 1) // m) * m


def _linear_kernel(x_ref, w_ref, b_ref, o_ref):
    # x_ref: (TB, D), w_ref: (C, D), b_ref: (1, C), o_ref: (TB, C)
    acc = lax.dot_general(
        x_ref[...], w_ref[...],
        dimension_numbers=(((1,), (1,)), ((), ())),   # contract last dims (x @ W^T)
        preferred_element_type=jnp.float32,
    )
    o_ref[...] = (acc + b_ref[...].astype(jnp.float32)).astype(o_ref.dtype)


def _dropout_linear_kernel(x_ref, mask_ref, w_ref, b_ref, o_ref):
    # mask already carries the 1/keep_prob scale (values are 0 or 1/keep_prob).
    x = (x_ref[...] * mask_ref[...]).astype(x_ref.dtype)
    acc = lax.dot_general(
        x, w_ref[...],
        dimension_numbers=(((1,), (1,)), ((), ())),
        preferred_element_type=jnp.float32,
    )
    o_ref[...] = (acc + b_ref[...].astype(jnp.float32)).astype(o_ref.dtype)


def feature_predict(x, w, b, *, key=None, p=0.3, training=True, tb_max=512):
    """x: [B, D], w: [C, D] (PyTorch layout), b: [C]  ->  out: [B, C]."""
    B, D = x.shape
    C, D2 = w.shape
    assert D == D2, "weight inner dim must match feature dim"
    dtype = x.dtype

    # Batch tile: multiple of 8 sublanes, capped so VMEM stays small even for
    # large D (re-derive against 32 MiB scoped VMEM if D grows a lot).
    TB = min(tb_max, _round_up(B, 8))
    B_pad = _round_up(B, TB)
    if B_pad != B:
        x = jnp.pad(x, ((0, B_pad - B), (0, 0)))

    b2 = b.reshape(1, C)
    grid = (B_pad // TB,)

    x_spec = pl.BlockSpec((TB, D), lambda i: (i, 0))
    w_spec = pl.BlockSpec((C, D), lambda i: (0, 0))   # resident across the grid
    b_spec = pl.BlockSpec((1, C), lambda i: (0, 0))   # resident across the grid
    o_spec = pl.BlockSpec((TB, C), lambda i: (i, 0))

    compiler_params = pltpu.CompilerParams(dimension_semantics=("parallel",))
    out_shape = jax.ShapeDtypeStruct((B_pad, C), dtype)

    apply_dropout = training and p > 0.0
    if apply_dropout:
        keep_prob = 1.0 - float(p)
        if keep_prob <= 0.0:
            # p >= 1: everything dropped (no 1/keep_prob scale, no inf hazard).
            mask = jnp.zeros((B_pad, D), dtype)
        else:
            if key is None:
                key = jax.random.PRNGKey(0)
            keep = jax.random.bernoulli(key, keep_prob, (B, D))
            mask = (keep.astype(jnp.float32) * (1.0 / keep_prob)).astype(dtype)
            if B_pad != B:
                mask = jnp.pad(mask, ((0, B_pad - B), (0, 0)))
        mask_spec = pl.BlockSpec((TB, D), lambda i: (i, 0))
        out = pl.pallas_call(
            _dropout_linear_kernel,
            out_shape=out_shape,
            grid=grid,
            in_specs=[x_spec, mask_spec, w_spec, b_spec],
            out_specs=o_spec,
            compiler_params=compiler_params,
        )(x, mask, w, b2)
    else:
        out = pl.pallas_call(
            _linear_kernel,
            out_shape=out_shape,
            grid=grid,
            in_specs=[x_spec, w_spec, b_spec],
            out_specs=o_spec,
            compiler_params=compiler_params,
        )(x, w, b2)

    return out[:B] if B_pad != B else out


if __name__ == "__main__":
    # Shapes consistent with the module: global_feature_layer_dim=256 (default),
    # num_classes=16, batch=8.
    B, D, C = 8, 256, 16
    p = 0.3

    key = jax.random.PRNGKey(0)
    kx, kw, kb, kdrop = jax.random.split(key, 4)
    x = jax.random.normal(kx, (B, D), dtype=jnp.float32)
    # Deterministic init mimicking nn.Linear's uniform(-1/sqrt(D), 1/sqrt(D)).
    bound = 1.0 / jnp.sqrt(jnp.float32(D))
    w = jax.random.uniform(kw, (C, D), dtype=jnp.float32, minval=-bound, maxval=bound)
    b = jax.random.uniform(kb, (C,), dtype=jnp.float32, minval=-bound, maxval=bound)

    # Eval mode: dropout is identity -> compare against a pure-JAX reference.
    out_eval = feature_predict(x, w, b, p=p, training=False)
    out_eval = jax.block_until_ready(out_eval)
    ref_eval = x @ w.T + b
    assert jnp.allclose(out_eval, ref_eval, atol=1e-4, rtol=1e-4), "eval mismatch"

    # Training mode: mask is deterministic given the key, so we can rebuild the
    # exact reference and compare end-to-end.
    out_train = feature_predict(x, w, b, key=kdrop, p=p, training=True)
    out_train = jax.block_until_ready(out_train)
    keep_prob = 1.0 - p
    keep_ref = jax.random.bernoulli(kdrop, keep_prob, (B, D))
    x_drop_ref = x * keep_ref.astype(jnp.float32) / keep_prob
    ref_train = x_drop_ref @ w.T + b
    assert out_train.shape == (B, C)
    assert jnp.all(jnp.isfinite(out_train))
    assert jnp.allclose(out_train, ref_train, atol=1e-4, rtol=1e-4), "train mismatch"

    # Larger batch exercises the multi-step grid + row padding path.
    B2 = 1000
    x2 = jax.random.normal(kx, (B2, D), dtype=jnp.float32)
    out_big = feature_predict(x2, w, b, p=p, training=False)
    out_big = jax.block_until_ready(out_big)
    ref_big = x2 @ w.T + b
    assert out_big.shape == (B2, C)
    assert jnp.allclose(out_big, ref_big, atol=1e-4, rtol=1e-4), "big-batch mismatch"

    print("KERNEL_OK")
</pallas_src>

<mosaic_0001>
module attributes {stable_mosaic.version = 11 : i64} {
  func.func @_linear_kernel(%arg0: i32, %arg1: memref<8x256xf32, #tpu.memory_space<vmem>>, %arg2: memref<16x256xf32, #tpu.memory_space<vmem>>, %arg3: memref<1x16xf32, #tpu.memory_space<vmem>>, %arg4: memref<8x16xf32, #tpu.memory_space<vmem>>) attributes {dimension_semantics = [#tpu.dimension_semantics<parallel>], iteration_bounds = array<i64: 1>, scalar_prefetch = 0 : i64, scratch_operands = 0 : i64, tpu.core_type = #tpu.core_type<tc>, window_params = [{transform_indices = @transform_0, window_bounds = array<i64: 8, 256>}, {pipeline_mode = #tpu.pipeline_mode<synchronous>, transform_indices = @transform_1, window_bounds = array<i64: 16, 256>}, {pipeline_mode = #tpu.pipeline_mode<synchronous>, transform_indices = @transform_2, window_bounds = array<i64: 1, 16>}, {transform_indices = @transform_3, window_bounds = array<i64: 8, 16>}]} {
    %c0 = arith.constant 0 : index
    %c0_0 = arith.constant 0 : index
    %0 = vector.load %arg1[%c0, %c0_0] : memref<8x256xf32, #tpu.memory_space<vmem>>, vector<8x256xf32>
    %c0_1 = arith.constant 0 : index
    %c0_2 = arith.constant 0 : index
    %1 = vector.load %arg2[%c0_1, %c0_2] : memref<16x256xf32, #tpu.memory_space<vmem>>, vector<16x256xf32>
    %cst = arith.constant dense<0.000000e+00> : vector<8x16xf32>
    %2 = tpu.matmul %0, %1, %cst {dimension_numbers = #tpu.dot_dimension_numbers<[1], [1], [0], [0], [0, 0, 1, 0], [], []>} : vector<8x256xf32>, vector<16x256xf32>, vector<8x16xf32> -> vector<8x16xf32>
    %c0_3 = arith.constant 0 : index
    %c0_4 = arith.constant 0 : index
    %3 = vector.load %arg3[%c0_3, %c0_4] : memref<1x16xf32, #tpu.memory_space<vmem>>, vector<1x16xf32>
    %4 = vector.broadcast %3 : vector<1x16xf32> to vector<8x16xf32>
    %5 = arith.addf %2, %4 : vector<8x16xf32>
    %c0_5 = arith.constant 0 : index
    %c0_6 = arith.constant 0 : index
    %6 = vector.load %arg4[%c0_5, %c0_6] : memref<8x16xf32, #tpu.memory_space<vmem>>, vector<8x16xf32>
    tpu.vector_store %arg4[%c0_5, %c0_6], %5 {strides = array<i32>} : memref<8x16xf32, #tpu.memory_space<vmem>>, vector<8x16xf32>,
    return
  }
  func.func @transform_0(%arg0: i32) -> (i32, i32) {
    %c0_i32 = arith.constant 0 : i32
    %c0_i32_0 = arith.constant 0 : i32
    return %arg0, %c0_i32 : i32, i32
  }
  func.func @transform_1(%arg0: i32) -> (i32, i32) {
    %c0_i32 = arith.constant 0 : i32
    %c0_i32_0 = arith.constant 0 : i32
    %c0_i32_1 = arith.constant 0 : i32
    return %c0_i32, %c0_i32_0 : i32, i32
  }
  func.func @transform_2(%arg0: i32) -> (i32, i32) {
    %c0_i32 = arith.constant 0 : i32
    %c0_i32_0 = arith.constant 0 : i32
    %c0_i32_1 = arith.constant 0 : i32
    return %c0_i32, %c0_i32_0 : i32, i32
  }
  func.func @transform_3(%arg0: i32) -> (i32, i32) {
    %c0_i32 = arith.constant 0 : i32
    %c0_i32_0 = arith.constant 0 : i32
    return %arg0, %c0_i32 : i32, i32
  }
}

</mosaic_0001>

<llo_original>
// kernel: tpu_custom_call.1
$region0: #{tpu_custom_call.1}
  #allocation0 [shape = 'u32[]', space=smem, size = 0x4, offset = 0x4, fixed_abs, tag = 'smem constant byte address 0x4 - core index']
  #allocation1 [shape = 'u32[144,128]{1,0:T(1,128)}', space=vmem, size = 0x12000, scoped, tag = 'internal scratch']
  %s0 = inlined_call_operand.hbm [shape: f32[8,256], index: 0, kind: input, shape index: {}]
  %s1 = inlined_call_operand.hbm [shape: f32[16,256], index: 1, kind: input, shape index: {}]
  %s2 = inlined_call_operand.vmem [shape: f32[1,16], index: 2, kind: input, shape index: {}]
  %s3 = inlined_call_operand.hbm [shape: f32[8,16], index: 3, kind: output, shape index: {}]
  %s4 = sld [smem:[#allocation0]]
  $region30: #{tpu_custom_call.1} parent=0
    _
  %s6 = ssub.s32 1, %s4
  %s7 = scalar_select 0, %s6, %s4
  $region1: #{tpu_custom_call.1} parent=0
    #allocation2 [shape = 'u8[8192]{0}', space=vmem, size = 0x2000, scoped, tag = 'input window, operand 0, single buffered']
    #allocation3 [shape = 's32[1]{0}', space=sflag, size = 0x4, scoped, tag = 'scoped memory for tpu_custom_call.1']
    #allocation4 [shape = 's32[1]{0}', space=sflag, size = 0x4, scoped, tag = 'scoped memory for tpu_custom_call.1']
    #allocation5 [shape = 'u8[16384]{0}', space=vmem, size = 0x4000, scoped, tag = 'input window, operand 1, single buffered']
    #allocation6 [shape = 's32[1]{0}', space=sflag, size = 0x4, scoped, tag = 'scoped memory for tpu_custom_call.1']
    #allocation7 [shape = 'u8[4096]{0}', space=vmem, size = 0x1000, scoped, tag = 'output window, operand 0, single buffered']
    %8 = vsyncpa [#allocation3], 0
    %9 = vsyncpa [#allocation6], 0
    %10 = vsyncpa [#allocation4], 0
    // Predicated region
    $region2: #{tpu_custom_call.1} parent=1 // pred_check
      _
    $region3: #{tpu_custom_call.1} parent=1 // pred_check_branch
      %12 = sbr.rel (0) target = $region5
    $region4: #{tpu_custom_call.1} parent=1 // pred_region
      %s14 = ssub.s32 256, 256
      %15 = vsyncadd [#allocation3], %s14
      %s17 = sshll.u32 [#allocation2], 4
      %s18 = int_to_ptr.vmem [resolvable:$true] %s17
      %20 = dma.hbm_to_vmem [thread:$0]  %s0, 256, %s18, [#allocation3]
    $region5: #{tpu_custom_call.1} parent=1 // pred_fallthru
      _
    // Predicated region
    $region6: #{tpu_custom_call.1} parent=1 // pred_check
      _
    $region7: #{tpu_custom_call.1} parent=1 // pred_check_branch
      %22 = sbr.rel (0) target = $region9
    $region8: #{tpu_custom_call.1} parent=1 // pred_region
      %s24 = ssub.s32 512, 512
      %25 = vsyncadd [#allocation6], %s24
      %s26 = sshll.u32 [#allocation5], 4
      %s27 = int_to_ptr.vmem [resolvable:$true] %s26
      %32 = dma.hbm_to_vmem [thread:$0]  %s1, 512, %s27, [#allocation6], 256, 256, 16
    $region9: #{tpu_custom_call.1} parent=1 // pred_fallthru
      _
    // Predicated region
    $region10: #{tpu_custom_call.1} parent=1 // pred_check
      _
    $region11: #{tpu_custom_call.1} parent=1 // pred_check_branch
      %34 = sbr.rel (0) target = $region13
    $region12: #{tpu_custom_call.1} parent=1 // pred_region
      _
    $region13: #{tpu_custom_call.1} parent=1 // pred_fallthru
      _
    // Predicated region
    $region14: #{tpu_custom_call.1} parent=1 // pred_check
      _
    $region15: #{tpu_custom_call.1} parent=1 // pred_check_branch
      %36 = sbr.rel (0) target = $region17
    $region16: #{tpu_custom_call.1} parent=1 // pred_region
      %37 = dma.done [#allocation3], 256
    $region17: #{tpu_custom_call.1} parent=1 // pred_fallthru
      _
    // Predicated region
    $region18: #{tpu_custom_call.1} parent=1 // pred_check
      _
    $region19: #{tpu_custom_call.1} parent=1 // pred_check_branch
      %39 = sbr.rel (0) target = $region21
    $region20: #{tpu_custom_call.1} parent=1 // pred_region
      %40 = dma.done [#allocation6], 512
    $region21: #{tpu_custom_call.1} parent=1 // pred_fallthru
      _
    %v41 = vld [vmem:[#allocation2] sm:$0xff]
    %v42 = vld [vmem:[#allocation2 + $0x8] sm:$0xff]
    %v43 = vld [vmem:[#allocation5] sm:$0xff]
    %v44 = vld [vmem:[#allocation5 + $0x8] sm:$0xff]
    %v45 = vld [vmem:[#allocation5 + $0x10] sm:$0xff]
    %v46 = vld [vmem:[#allocation5 + $0x18] sm:$0xff]
    %v47 = vld [vmem:[%s2] sm:$0x1]
    %v49 = vlaneseq
    %v50 = vshrl.u32 %v49, 7
    %v51 = vsub.s32 0, %v50
    %v52 = vrot.slane %v47, %v51
    %54 = vmatprep.subr.mxu0 %v44
    %55 = vmatpush1.xpose.msra.mxu0 %v43
    %56 = vmatprep.subr.mxu0 %v46
    %57 = vmatpush1.xpose.msra.mxu0 %v45
    %58 = vmatprep.subr.mxu0 0.0
    %59 = vmatpush1.xpose.msra.mxu0 0.0
    %60 = vmatprep.subr.mxu0 0.0
    %61 = vmatpush1.xpose.msra.mxu0 0.0
    %62 = vmatprep.subr.mxu0 0.0
    %63 = vmatpush1.xpose.msra.mxu0 0.0
    %64 = vmatprep.subr.mxu0 0.0
    %65 = vmatpush1.xpose.msra.mxu0 0.0
    %66 = vmatprep.subr.mxu0 0.0
    %67 = vmatpush1.xpose.msra.mxu0 0.0
    %68 = vmatprep.subr.mxu0 0.0
    %69 = vmatpush1.xpose.msra.mxu0 0.0
    %70 = vmatprep.subr.mxu0 0.0
    %71 = vmatpush1.xpose.msra.mxu0 0.0
    %72 = vmatprep.subr.mxu0 0.0
    %73 = vmatpush1.xpose.msra.mxu0 0.0
    %74 = vmatprep.subr.mxu0 0.0
    %75 = vmatpush1.xpose.msra.mxu0 0.0
    %76 = vmatprep.subr.mxu0 0.0
    %77 = vmatpush1.xpose.msra.mxu0 0.0
    %78 = vmatprep.subr.mxu0 0.0
    %79 = vmatpush1.xpose.msra.mxu0 0.0
    %80 = vmatprep.subr.mxu0 0.0
    %81 = vmatpush1.xpose.msra.mxu0 0.0
    %82 = vmatprep.subr.mxu0 0.0
    %83 = vmatpush1.xpose.msra.mxu0 0.0
    %84 = vmatprep.subr.mxu0 0.0
    %85 = vmatpush1.xpose.msra.mxu0 0.0
    %86 = vmatprep.subr.mxu0 0.0
    %87 = vmatpush1.xpose.msra.mxu0 0.0
    %88 = vmatprep.subr.mxu0 0.0
    %89 = vmatpush1.xpose.msra.mxu0 0.0
    %90 = vmatprep.subr.mxu0 0.0
    %91 = vmatpush1.xpose.msra.mxu0 0.0
    %92 = vmatprep.subr.mxu0 0.0
    %93 = vmatpush1.xpose.msra.mxu0 0.0
    %94 = vmatprep.subr.mxu0 0.0
    %95 = vmatpush1.xpose.msra.mxu0 0.0
    %96 = vmatprep.subr.mxu0 0.0
    %97 = vmatpush1.xpose.msra.mxu0 0.0
    %98 = vmatprep.subr.mxu0 0.0
    %99 = vmatpush1.xpose.msra.mxu0 0.0
    %100 = vmatprep.subr.mxu0 0.0
    %101 = vmatpush1.xpose.msra.mxu0 0.0
    %102 = vmatprep.subr.mxu0 0.0
    %103 = vmatpush1.xpose.msra.mxu0 0.0
    %104 = vmatprep.subr.mxu0 0.0
    %105 = vmatpush1.xpose.msra.mxu0 0.0
    %106 = vmatprep.subr.mxu0 0.0
    %107 = vmatpush1.xpose.msra.mxu0 0.0
    %108 = vmatprep.subr.mxu0 0.0
    %109 = vmatpush1.xpose.msra.mxu0 0.0
    %110 = vmatprep.subr.mxu0 0.0
    %111 = vmatpush1.xpose.msra.mxu0 0.0
    %112 = vmatprep.subr.mxu0 0.0
    %113 = vmatpush1.xpose.msra.mxu0 0.0
    %114 = vmatprep.subr.mxu0 0.0
    %115 = vmatpush1.xpose.msra.mxu0 0.0
    %116 = vmatprep.subr.mxu0 0.0
    %117 = vmatpush1.xpose.msra.mxu0 0.0
    %118 = vmatprep.mubr.f32.mxu0 %v42
    %119 = vmatmul.mubr.f32.gmra.mrb[0].mxu0 %v41
    %v120 = vpop.f32.mrb[0].mxu0
    %v121 = vadd.f32 %v52, %v120
    %v122 = vpop.f32.mrb[0].mxu0
    %123 = vdwg.mxu0
    %vm124 = vcmask 130048
    %125 = vst.msk [vmem:[#allocation7] sm:$0xff] %vm124, %v121
    // Predicated region
    $region22: #{tpu_custom_call.1} parent=1 // pred_check
      _
    $region23: #{tpu_custom_call.1} parent=1 // pred_check_branch
      %127 = sbr.rel (0) target = $region25
    $region24: #{tpu_custom_call.1} parent=1 // pred_region
      %s129 = ssub.s32 128, 128
      %130 = vsyncadd [#allocation4], %s129
      %s132 = sshll.u32 [#allocation7], 4
      %s133 = int_to_ptr.vmem [resolvable:$true] %s132
      %135 = dma.vmem_to_hbm [thread:$0]  %s133, 128, %s3, [#allocation4]
    $region25: #{tpu_custom_call.1} parent=1 // pred_fallthru
      _
    // Predicated region
    $region26: #{tpu_custom_call.1} parent=1 // pred_check
      _
    $region27: #{tpu_custom_call.1} parent=1 // pred_check_branch
      %137 = sbr.rel (0) target = $region29
    $region28: #{tpu_custom_call.1} parent=1 // pred_region
      %138 = dma.done [#allocation4], 128
    $region29: #{tpu_custom_call.1} parent=1 // pred_fallthru
      _
    %139 = vsyncpa [#allocation3], 1
    %140 = vsyncpa [#allocation6], 1
    %141 = vsyncpa [#allocation4], 1

</llo_original>
